<compile_context>
chip_gen: v6e
topology: v6e:2x2x1
jax: 0.10.0
libtpu: 0.0.40
codegen_flags: <defaults>
</compile_context>

<pallas_src>
import functools

import jax
import jax.numpy as jnp
import numpy as np
from jax import lax
from jax.experimental import pallas as pl
from jax.experimental.pallas import tpu as pltpu


def _kmeans_assign_kernel(f_ref, c_ref, labels_ref, ac_ref):
    # f_ref: (1, D, TN)    c_ref: (1, K, D)
    # labels_ref: (1, 1, TN) int32 (lane-dense)    ac_ref: (1, D, TN) (lane-dense)
    f = f_ref[0]                                    # (D, TN), native dtype (bf16 stays bf16)
    c = c_ref[0].astype(f.dtype)                    # (K, D), mirrors torch `centroids.to(feats)`

    # ||c_k||^2 in f32 on the VPU (tiny: K x D, hidden under the feats-tile DMA).
    c32 = c.astype(jnp.float32)
    c2 = jnp.sum(c32 * c32, axis=-1, keepdims=True)             # (K, 1) f32

    # Cross term on the MXU: (K, D) @ (D, TN) -> (K, TN), f32 accumulation, lane-dense in N.
    cross = lax.dot_general(
        c, f, (((1,), (0,)), ((), ())), preferred_element_type=jnp.float32)

    # argmin_k ||f - c_k||^2 == argmin_k (||c_k||^2 - 2 f.c_k): the per-row ||f||^2 constant,
    # the clamp and the sqrt are argmin-invariant, so labels are identical.
    score = c2 - 2.0 * cross                                    # (K, TN) f32

    # First-min argmin over the K (sublane) axis via min-reduce + iota (Mosaic-friendly).
    k = score.shape[0]
    min_score = jnp.min(score, axis=0, keepdims=True)           # (1, TN)
    idx = lax.broadcasted_iota(jnp.int32, score.shape, 0)       # (K, TN)
    labels = jnp.min(jnp.where(score == min_score, idx, k),
                     axis=0, keepdims=True).astype(jnp.int32)   # (1, TN), lane-dense

    # Gather assigned centroids with a one-hot matmul (MXU, no gather op); onehot is 0/1 so the
    # result is exact in the feats/output dtype.  Produced directly as (D, TN) -> lane-dense store.
    onehot = (idx == labels).astype(c.dtype)                    # (K, TN)
    assigned = lax.dot_general(
        c, onehot, (((0,), (0,)), ((), ())),
        preferred_element_type=jnp.float32)                     # (D, TN)

    labels_ref[...] = labels[None]
    ac_ref[...] = assigned[None].astype(ac_ref.dtype)


def _pick_tile_n(n, d, itemsize, vmem_budget_bytes=8 << 20):
    """Largest N tile such that double-buffered feats + assigned tiles stay within budget
    (budget sized to be safe even for v5e's 16 MiB scoped default / v7x's 64 MiB VMEM)."""
    d_pad = max(8, -(-d // 8) * 8)                       # D sits on the sublane axis
    bytes_per_lane = 2 * 2 * d_pad * max(itemsize, 2)    # (feats + assigned) x double buffers
    tn = vmem_budget_bytes // max(bytes_per_lane, 1)
    tn = max(128, min(8192, (tn // 128) * 128))          # multiple of 128 lanes
    return int(n if n <= tn else tn)


@functools.partial(jax.jit, static_argnames=("tile_n",))
def kmeans_multi_forward_qdn(f_qdn, centroids, *, tile_n=None):
    """Quantizer-major, lane-dense fast path (no layout transposes around the kernel).

    f_qdn: [Q, D, N], centroids: [Q, K, D] ->
      (labels [Q, N] int32, assigned_centroids [Q, D, N] in f_qdn.dtype).
    """
    Q, D, N = f_qdn.shape
    Qc, K, Dc = centroids.shape
    assert Q == Qc and D == Dc
    if tile_n is None:
        tile_n = _pick_tile_n(N, D, jnp.dtype(f_qdn.dtype).itemsize)
    n_tiles = pl.cdiv(N, tile_n)

    labels3, assigned = pl.pallas_call(
        _kmeans_assign_kernel,
        out_shape=(
            jax.ShapeDtypeStruct((Q, 1, N), jnp.int32),
            jax.ShapeDtypeStruct((Q, D, N), f_qdn.dtype),
        ),
        grid_spec=pltpu.PrefetchScalarGridSpec(
            num_scalar_prefetch=0,
            grid=(Q, n_tiles),                       # N axis innermost
            in_specs=[
                pl.BlockSpec((1, D, tile_n), lambda q, n: (q, 0, n)),
                pl.BlockSpec((1, K, D), lambda q, n: (q, 0, 0)),     # constant in n: no re-DMA
            ],
            out_specs=[
                pl.BlockSpec((1, 1, tile_n), lambda q, n: (q, 0, n)),  # lane-dense labels
                pl.BlockSpec((1, D, tile_n), lambda q, n: (q, 0, n)),  # lane-dense assigned
            ],
        ),
        compiler_params=pltpu.CompilerParams(
            dimension_semantics=("parallel", "parallel"),
            vmem_limit_bytes=32 * 1024 * 1024,
        ),
    )(f_qdn, centroids)

    return labels3[:, 0, :], assigned


@jax.jit
def kmeans_multi_forward(feats, centroids):
    """PyTorch-layout compatibility wrapper.

    feats: [*batch_shape, D, Q], centroids: [Q, K, D] ->
      (labels [*batch_shape, Q] int32, assigned_centroids [*batch_shape, D, Q]).

    Note: the transposes here are extra HBM passes around a bandwidth-bound kernel;
    use `kmeans_multi_forward_qdn` with quantizer-major data when the caller allows it.
    """
    *batch_shape, D, Q = feats.shape
    N = int(np.prod(batch_shape)) if batch_shape else 1
    f_qdn = jnp.transpose(feats.reshape(N, D, Q), (2, 1, 0))     # (Q, D, N)
    labels_qn, assigned_qdn = kmeans_multi_forward_qdn(f_qdn, centroids)
    labels = jnp.moveaxis(labels_qn, 0, -1).reshape(*batch_shape, Q)
    assigned = jnp.transpose(assigned_qdn, (2, 1, 0)).reshape(*batch_shape, D, Q)
    return labels, assigned


def _reference_forward(feats, centroids):
    """Pure-JAX reference mirroring KMeansQuantizer.forward per quantizer."""
    *batch_shape, D, Q = feats.shape
    N = int(np.prod(batch_shape)) if batch_shape else 1
    f = feats.reshape(N, D, Q)
    labels_list, ac_list = [], []
    for q in range(Q):
        fq = f[..., q].astype(jnp.float32)                       # (N, D)
        cq = centroids[q].astype(jnp.float32)                    # (K, D)
        d2 = (jnp.sum(fq ** 2, -1)[:, None] + jnp.sum(cq ** 2, -1)[None]
              - 2.0 * fq @ cq.T)
        dist = jnp.sqrt(jnp.clip(d2, 0.0))
        lab = jnp.argmin(dist, axis=-1)
        labels_list.append(lab)
        ac_list.append(cq[lab])
    labels = jnp.stack(labels_list, axis=-1).reshape(*batch_shape, Q)
    ac = jnp.stack(ac_list, axis=-1).reshape(*batch_shape, D, Q).astype(feats.dtype)
    return labels, ac


if __name__ == "__main__":
    # Two quantizers, each: num_features=32, num_clusters=4; batch=2, seq=8.
    Q, K, D = 2, 4, 32
    batch, seq = 2, 8

    key = jax.random.PRNGKey(0)
    k_feats, k_cent = jax.random.split(key)
    feats = jax.random.normal(k_feats, (batch, seq, D, Q), dtype=jnp.float32)
    # Deterministic synthetic centroids (stand-in for the "random"-from-batch init).
    centroids = jax.random.normal(k_cent, (Q, K, D), dtype=jnp.float32)

    # PyTorch-layout compatibility path.
    labels, assigned = kmeans_multi_forward(feats, centroids)
    jax.block_until_ready((labels, assigned))

    # Quantizer-major, lane-dense fast path (no transposes around the kernel).
    f_qdn = jnp.transpose(feats.reshape(batch * seq, D, Q), (2, 1, 0))
    labels_qn, assigned_qdn = kmeans_multi_forward_qdn(f_qdn, centroids)
    jax.block_until_ready((labels_qn, assigned_qdn))

    ref_labels, ref_assigned = _reference_forward(feats, centroids)
    assert labels.shape == (batch, seq, Q)
    assert assigned.shape == (batch, seq, D, Q)
    np.testing.assert_array_equal(np.asarray(labels), np.asarray(ref_labels))
    np.testing.assert_allclose(np.asarray(assigned), np.asarray(ref_assigned),
                               rtol=1e-5, atol=1e-5)
    np.testing.assert_array_equal(
        np.asarray(jnp.moveaxis(labels_qn, 0, -1).reshape(batch, seq, Q)),
        np.asarray(ref_labels))
    np.testing.assert_allclose(
        np.asarray(jnp.transpose(assigned_qdn, (2, 1, 0)).reshape(batch, seq, D, Q)),
        np.asarray(ref_assigned), rtol=1e-5, atol=1e-5)

    print("KERNEL_OK")
</pallas_src>

<mosaic_0001>
module attributes {stable_mosaic.version = 11 : i64} {
  func.func @_kmeans_assign_kernel(%arg0: i32, %arg1: i32, %arg2: memref<1x32x16xf32, #tpu.memory_space<vmem>>, %arg3: memref<1x4x32xf32, #tpu.memory_space<vmem>>, %arg4: memref<1x1x16xi32, #tpu.memory_space<vmem>>, %arg5: memref<1x32x16xf32, #tpu.memory_space<vmem>>) attributes {dimension_semantics = [#tpu.dimension_semantics<parallel>, #tpu.dimension_semantics<parallel>], iteration_bounds = array<i64: 2, 1>, scalar_prefetch = 0 : i64, scratch_operands = 0 : i64, tpu.core_type = #tpu.core_type<tc>, window_params = [{transform_indices = @transform_0, window_bounds = array<i64: 1, 32, 16>}, {transform_indices = @transform_1, window_bounds = array<i64: 1, 4, 32>}, {transform_indices = @transform_2, window_bounds = array<i64: 1, 1, 16>}, {transform_indices = @transform_3, window_bounds = array<i64: 1, 32, 16>}]} {
    %c0 = arith.constant 0 : index
    %c0_0 = arith.constant 0 : index
    %c0_1 = arith.constant 0 : index
    %0 = vector.load %arg2[%c0, %c0_0, %c0_1] : memref<1x32x16xf32, #tpu.memory_space<vmem>>, vector<1x32x16xf32>
    %1 = vector.shape_cast %0 : vector<1x32x16xf32> to vector<32x16xf32>
    %c0_2 = arith.constant 0 : index
    %c0_3 = arith.constant 0 : index
    %c0_4 = arith.constant 0 : index
    %2 = vector.load %arg3[%c0_2, %c0_3, %c0_4] : memref<1x4x32xf32, #tpu.memory_space<vmem>>, vector<1x4x32xf32>
    %3 = vector.shape_cast %2 : vector<1x4x32xf32> to vector<4x32xf32>
    %4 = arith.mulf %3, %3 : vector<4x32xf32>
    %cst = arith.constant dense<0.000000e+00> : vector<4xf32>
    %5 = vector.multi_reduction <add>, %4, %cst [1] : vector<4x32xf32> to vector<4xf32>
    %6 = vector.shape_cast %5 : vector<4xf32> to vector<4x1xf32>
    %cst_5 = arith.constant dense<0.000000e+00> : vector<4x16xf32>
    %7 = tpu.matmul %3, %1, %cst_5 {dimension_numbers = #tpu.dot_dimension_numbers<[1], [0], [0], [1], [0, 0, 1, 1], [], []>} : vector<4x32xf32>, vector<32x16xf32>, vector<4x16xf32> -> vector<4x16xf32>
    %cst_6 = arith.constant 2.000000e+00 : f32
    %8 = vector.broadcast %cst_6 : f32 to vector<4x16xf32>
    %9 = arith.mulf %8, %7 : vector<4x16xf32>
    %10 = vector.broadcast %6 : vector<4x1xf32> to vector<4x16xf32>
    %11 = arith.subf %10, %9 : vector<4x16xf32>
    %cst_7 = arith.constant dense<0x7F800000> : vector<16xf32>
    %12 = vector.multi_reduction <minimumf>, %11, %cst_7 [0] : vector<4x16xf32> to vector<16xf32>
    %13 = vector.shape_cast %12 : vector<16xf32> to vector<1x16xf32>
    %14 = tpu.iota {dimensions = array<i32: 0>} : vector<4x16xi32>
    %15 = vector.broadcast %13 : vector<1x16xf32> to vector<4x16xf32>
    %16 = arith.cmpf oeq, %11, %15 : vector<4x16xf32>
    %c4_i32 = arith.constant 4 : i32
    %17 = vector.broadcast %c4_i32 : i32 to vector<4x16xi32>
    %18 = arith.select %16, %14, %17 : vector<4x16xi1>, vector<4x16xi32>
    %cst_8 = arith.constant dense<2147483647> : vector<16xi32>
    %19 = vector.multi_reduction <minsi>, %18, %cst_8 [0] : vector<4x16xi32> to vector<16xi32>
    %20 = vector.shape_cast %19 : vector<16xi32> to vector<1x16xi32>
    %21 = vector.broadcast %20 : vector<1x16xi32> to vector<4x16xi32>
    %22 = arith.cmpi eq, %14, %21 : vector<4x16xi32>
    %23 = arith.extui %22 : vector<4x16xi1> to vector<4x16xi32>
    %24 = arith.sitofp %23 : vector<4x16xi32> to vector<4x16xf32>
    %cst_9 = arith.constant dense<0.000000e+00> : vector<32x16xf32>
    %25 = tpu.matmul %3, %24, %cst_9 {dimension_numbers = #tpu.dot_dimension_numbers<[0], [0], [1], [1], [0, 1, 1, 1], [], []>} : vector<4x32xf32>, vector<4x16xf32>, vector<32x16xf32> -> vector<32x16xf32>
    %26 = vector.shape_cast %20 : vector<1x16xi32> to vector<1x1x16xi32>
    %c0_10 = arith.constant 0 : index
    %c0_11 = arith.constant 0 : index
    %c0_12 = arith.constant 0 : index
    %27 = vector.load %arg4[%c0_10, %c0_11, %c0_12] : memref<1x1x16xi32, #tpu.memory_space<vmem>>, vector<1x1x16xi32>
    tpu.vector_store %arg4[%c0_10, %c0_11, %c0_12], %26 {strides = array<i32>} : memref<1x1x16xi32, #tpu.memory_space<vmem>>, vector<1x1x16xi32>,
    %28 = vector.shape_cast %25 : vector<32x16xf32> to vector<1x32x16xf32>
    %c0_13 = arith.constant 0 : index
    %c0_14 = arith.constant 0 : index
    %c0_15 = arith.constant 0 : index
    %29 = vector.load %arg5[%c0_13, %c0_14, %c0_15] : memref<1x32x16xf32, #tpu.memory_space<vmem>>, vector<1x32x16xf32>
    tpu.vector_store %arg5[%c0_13, %c0_14, %c0_15], %28 {strides = array<i32>} : memref<1x32x16xf32, #tpu.memory_space<vmem>>, vector<1x32x16xf32>,
    return
  }
  func.func @transform_0(%arg0: i32, %arg1: i32) -> (i32, i32, i32) {
    %c0_i32 = arith.constant 0 : i32
    %c0_i32_0 = arith.constant 0 : i32
    return %arg0, %c0_i32, %arg1 : i32, i32, i32
  }
  func.func @transform_1(%arg0: i32, %arg1: i32) -> (i32, i32, i32) {
    %c0_i32 = arith.constant 0 : i32
    %c0_i32_0 = arith.constant 0 : i32
    %c0_i32_1 = arith.constant 0 : i32
    return %arg0, %c0_i32, %c0_i32_0 : i32, i32, i32
  }
  func.func @transform_2(%arg0: i32, %arg1: i32) -> (i32, i32, i32) {
    %c0_i32 = arith.constant 0 : i32
    %c0_i32_0 = arith.constant 0 : i32
    return %arg0, %c0_i32, %arg1 : i32, i32, i32
  }
  func.func @transform_3(%arg0: i32, %arg1: i32) -> (i32, i32, i32) {
    %c0_i32 = arith.constant 0 : i32
    %c0_i32_0 = arith.constant 0 : i32
    return %arg0, %c0_i32, %arg1 : i32, i32, i32
  }
}

</mosaic_0001>

<llo_original>
// kernel: kmeans_multi_forward_qdn.1
$region0: #{kmeans_multi_forward_qdn.1}
  #allocation0 [shape = 'u32[]', space=smem, size = 0x4, offset = 0x4, fixed_abs, tag = 'smem constant byte address 0x4 - core index']
  #allocation1 [shape = 'u32[144,128]{1,0:T(1,128)}', space=vmem, size = 0x12000, scoped, tag = 'internal scratch']
  %s0 = inlined_call_operand.vmem [shape: f32[2,32,16], index: 0, kind: input, shape index: {}]
  %s1 = inlined_call_operand.vmem [shape: f32[2,4,32], index: 1, kind: input, shape index: {}]
  %s2 = inlined_call_operand.hbm [shape: s32[2,1,16], index: 2, kind: output, shape index: {0}]
  %s3 = inlined_call_operand.vmem [shape: f32[2,32,16], index: 3, kind: output, shape index: {1}]
  %4 = xla_tuple %s2, %s3
  %s5 = sld [smem:[#allocation0]]
  $region49: #{kmeans_multi_forward_qdn.1} parent=0
    _
  %s7 = ssub.s32 1, %s5
  %s8 = scalar_select 0, %s7, %s5
  $region1: #{kmeans_multi_forward_qdn.1} parent=0
    #allocation2 [shape = 'u8[1024]{0}', space=vmem, size = 0x400, scoped, tag = 'output window, operand 0']
    #allocation3 [shape = 's32[2]{0}', space=sflag, size = 0x8, scoped, tag = 'scoped memory for kmeans_multi_forward_qdn.1']
    %9 = vsyncpa [#allocation3], 0
    %s10 = scalar_lea.sflag [#allocation3], 1
    %11 = vsyncpa %s10, 0
    loop: start=0, step=1, limit=4
    $region2: #{kmeans_multi_forward_qdn.1} parent=1 // loop_pre_header
      _
    $region3: #{kmeans_multi_forward_qdn.1} parent=1 // loop_header
      %s13 = sphi 0, %s17
      %p14 = scmp.ge.s32.totalorder %s13, 4
      %s20 = sphi 0, %s32
      %s21 = sphi 0, %s28
      %s22 = sphi 0, %s20
      %s23 = sphi 0, %s21
      %s24 = sphi 0, %s22
      %s25 = sphi 0, %s23
      %s37 = sphi 0, %s39
      %s40 = sphi 0, %s37
      %s41 = sphi 0, %s40
      %s57 = sphi 0, %s41
      %s63 = sphi 0, %s65
      %s66 = sphi 0, %s63
      %s67 = sphi 0, %s66
      %s83 = sphi 0, %s67
      %s91 = sphi 0, %s93
      %s94 = sphi 0, %s91
      %s95 = sphi 0, %s94
      %s111 = sphi 0, %s95
      %s119 = sphi 0, %s121
      %s122 = sphi 0, %s119
      %s123 = sphi 0, %s122
      %s139 = sphi 0, %s123
    $region4: #{kmeans_multi_forward_qdn.1} parent=1 // loop_header_branch
      %16 = sbr.rel (%p14) target = $region8
    $region5: #{kmeans_multi_forward_qdn.1} parent=1 // loop_body
      %s18 = ssub.s32 %s13, 1
      %s19 = ssub.s32 %s13, 2
      %s26 = sadd.s32 1, %s21
      %p27 = scmp.ge.s32.totalorder %s26, 1
      %s28 = scalar_select %p27, 0, %s26
      %s29 = sadd.s32 1, %s20
      %s30 = scalar_select %p27, %s29, %s20
      %p31 = scmp.ge.s32.totalorder %s30, 2
      %s32 = scalar_select %p31, 0, %s30
      %s33 = ssub.s32 %s20, %s32
      %s34 = ssub.s32 %s21, %s28
      %s35 = sor.u32 %s33, %s34
      %p36 = scmp.eq.s32.totalorder %s35, 0
      %s38 = sadd.s32 %s37, 1
      %s39 = scalar_select %p36, %s37, %s38
      %p42 = pneg %p36
      %p43 = scmp.eq.s32.totalorder %s13, 1
      %p44 = por %p42, %p43
      %p45 = scmp.ne.s32.totalorder %s37, %s40
      %p46 = scmp.eq.s32.totalorder %s13, 0
      %p47 = por %p45, %p46
      %p48 = scmp.ne.s32.totalorder %s37, %s40
      %p49 = scmp.eq.s32.totalorder %s18, 1
      %p50 = por %p48, %p49
      %p51 = scmp.ne.s32.totalorder %s40, %s41
      %p52 = scmp.eq.s32.totalorder %s18, 0
      %p53 = por %p51, %p52
      %p54 = scmp.ne.s32.totalorder %s40, %s41
      %p55 = scmp.eq.s32.totalorder %s19, 1
      %p56 = por %p54, %p55
      %p58 = scmp.ne.s32.totalorder %s41, %s57
      %p59 = scmp.eq.s32.totalorder %s19, 0
      %p60 = por %p58, %p59
      %s61 = ssub.s32 %s20, %s32
      %p62 = scmp.eq.s32.totalorder %s61, 0
      %s64 = sadd.s32 %s63, 1
      %s65 = scalar_select %p62, %s63, %s64
      %p68 = pneg %p62
      %p69 = scmp.eq.s32.totalorder %s13, 1
      %p70 = por %p68, %p69
      %p71 = scmp.ne.s32.totalorder %s63, %s66
      %p72 = scmp.eq.s32.totalorder %s13, 0
      %p73 = por %p71, %p72
      %p74 = scmp.ne.s32.totalorder %s63, %s66
      %p75 = scmp.eq.s32.totalorder %s18, 1
      %p76 = por %p74, %p75
      %p77 = scmp.ne.s32.totalorder %s66, %s67
      %p78 = scmp.eq.s32.totalorder %s18, 0
      %p79 = por %p77, %p78
      %p80 = scmp.ne.s32.totalorder %s66, %s67
      %p81 = scmp.eq.s32.totalorder %s19, 1
      %p82 = por %p80, %p81
      %p84 = scmp.ne.s32.totalorder %s67, %s83
      %p85 = scmp.eq.s32.totalorder %s19, 0
      %p86 = por %p84, %p85
      %s87 = ssub.s32 %s20, %s32
      %s88 = ssub.s32 %s21, %s28
      %s89 = sor.u32 %s87, %s88
      %p90 = scmp.eq.s32.totalorder %s89, 0
      %s92 = sadd.s32 %s91, 1
      %s93 = scalar_select %p90, %s91, %s92
      %p96 = pneg %p90
      %p97 = scmp.eq.s32.totalorder %s13, 1
      %p98 = por %p96, %p97
      %p99 = scmp.ne.s32.totalorder %s91, %s94
      %p100 = scmp.eq.s32.totalorder %s13, 0
      %p101 = por %p99, %p100
      %p102 = scmp.ne.s32.totalorder %s91, %s94
      %p103 = scmp.eq.s32.totalorder %s18, 1
      %p104 = por %p102, %p103
      %p105 = scmp.ne.s32.totalorder %s94, %s95
      %p106 = scmp.eq.s32.totalorder %s18, 0
      %p107 = por %p105, %p106
      %p108 = scmp.ne.s32.totalorder %s94, %s95
      %p109 = scmp.eq.s32.totalorder %s19, 1
      %p110 = por %p108, %p109
      %p112 = scmp.ne.s32.totalorder %s95, %s111
      %p113 = scmp.eq.s32.totalorder %s19, 0
      %p114 = por %p112, %p113
      %s115 = ssub.s32 %s20, %s32
      %s116 = ssub.s32 %s21, %s28
      %s117 = sor.u32 %s115, %s116
      %p118 = scmp.eq.s32.totalorder %s117, 0
      %s120 = sadd.s32 %s119, 1
      %s121 = scalar_select %p118, %s119, %s120
      %p124 = pneg %p118
      %p125 = scmp.eq.s32.totalorder %s13, 1
      %p126 = por %p124, %p125
      %p127 = scmp.ne.s32.totalorder %s119, %s122
      %p128 = scmp.eq.s32.totalorder %s13, 0
      %p129 = por %p127, %p128
      %p130 = scmp.ne.s32.totalorder %s119, %s122
      %p131 = scmp.eq.s32.totalorder %s18, 1
      %p132 = por %p130, %p131
      %p133 = scmp.ne.s32.totalorder %s122, %s123
      %p134 = scmp.eq.s32.totalorder %s18, 0
      %p135 = por %p133, %p134
      %p136 = scmp.ne.s32.totalorder %s122, %s123
      %p137 = scmp.eq.s32.totalorder %s19, 1
      %p138 = por %p136, %p137
      %p140 = scmp.ne.s32.totalorder %s123, %s139
      %p141 = scmp.eq.s32.totalorder %s19, 0
      %p142 = por %p140, %p141
      %p143 = scmp.le.s32.totalorder 1, %s13
      %p144 = scmp.lt.s32.totalorder %s13, 3
      %p145 = pnand %p143, %p144
      %p146 = pneg %p145
      // Predicated region
      $region9: #{kmeans_multi_forward_qdn.1} parent=5 // pred_check
        _
      $region10: #{kmeans_multi_forward_qdn.1} parent=5 // pred_check_branch
        %148 = sbr.rel (%p145) target = $region12
      $region11: #{kmeans_multi_forward_qdn.1} parent=5 // pred_region
        %s149 = ssub.s32 %s13, 1
      $region12: #{kmeans_multi_forward_qdn.1} parent=5 // pred_fallthru
        _
      %p150 = scmp.lt.s32.totalorder %s13, 2
      // Predicated region
      $region13: #{kmeans_multi_forward_qdn.1} parent=5 // pred_check
        %p151 = pneg %p150
      $region14: #{kmeans_multi_forward_qdn.1} parent=5 // pred_check_branch
        %153 = sbr.rel (%p151) target = $region16
      $region15: #{kmeans_multi_forward_qdn.1} parent=5 // pred_region
        // Predicated region
        $region17: #{kmeans_multi_forward_qdn.1} parent=15 // pred_check
          %p154 = pneg %p47
        $region18: #{kmeans_multi_forward_qdn.1} parent=15 // pred_check_branch
          %156 = sbr.rel (%p154) target = $region20
        $region19: #{kmeans_multi_forward_qdn.1} parent=15 // pred_region
          %p157 = scmp.lt.s32.totalorder %s20, 1
          %s158 = scalar_select %p157, %s20, 1
          %p159 = scmp.lt.s32.totalorder %s21, 0
          %s160 = scalar_select %p159, %s21, 0
          %s161 = smul.addr %s158, 4
          %s162 = sadd.s32 %s160, %s161
          %s163 = smul.addr %s162, 8
          %s164 = scalar_lea.vmem %s0, %s163
        $region20: #{kmeans_multi_forward_qdn.1} parent=15 // pred_fallthru
          _
        // Predicated region
        $region21: #{kmeans_multi_forward_qdn.1} parent=15 // pred_check
          %p165 = pneg %p73
        $region22: #{kmeans_multi_forward_qdn.1} parent=15 // pred_check_branch
          %167 = sbr.rel (%p165) target = $region24
        $region23: #{kmeans_multi_forward_qdn.1} parent=15 // pred_region
          %p168 = scmp.lt.s32.totalorder %s20, 1
          %s169 = scalar_select %p168, %s20, 1
          %s170 = smul.addr %s169, 4
          %s171 = scalar_lea.vmem %s1, %s170
        $region24: #{kmeans_multi_forward_qdn.1} parent=15 // pred_fallthru
          _
      $region16: #{kmeans_multi_forward_qdn.1} parent=5 // pred_fallthru
        _
      %p172 = scmp.le.s32.totalorder 1, %s13
      %p173 = scmp.lt.s32.totalorder %s13, 3
      %p174 = pnand %p172, %p173
      %p175 = pneg %p174
      // Predicated region
      $region25: #{kmeans_multi_forward_qdn.1} parent=5 // pred_check
        _
      $region26: #{kmeans_multi_forward_qdn.1} parent=5 // pred_check_branch
        %177 = sbr.rel (%p174) target = $region28
      $region27: #{kmeans_multi_forward_qdn.1} parent=5 // pred_region
        %s178 = ssub.s32 %s13, 1
        %p179 = scmp.lt.s32.totalorder %s22, 1
        %s180 = scalar_select %p179, %s22, 1
        %p181 = scmp.lt.s32.totalorder %s23, 0
        %s182 = scalar_select %p181, %s23, 0
        %s183 = smul.addr %s180, 4
        %s184 = sadd.s32 %s182, %s183
        %s185 = smul.addr %s184, 8
        %s186 = scalar_lea.vmem %s0, %s185
        %p187 = pneg %p53
        %p188 = pneg %p50
        %p189 = scmp.lt.s32.totalorder %s22, 1
        %s190 = scalar_select %p189, %s22, 1
        %s191 = smul.addr %s190, 4
        %s192 = scalar_lea.vmem %s1, %s191
        %p193 = pneg %p79
        %p194 = pneg %p76
        %p195 = pneg %p107
        %p196 = pneg %p104
        %s197 = sand.u32 %s94, 1
        %s198 = scalar_lea.sflag [#allocation3], %s197
        %s199 = sand.u32 %s94, 1
        %s200 = scalar_lea.vmem [#allocation2], %s199
        %p201 = pneg %p135
        %p202 = pneg %p132
        %p203 = scmp.lt.s32.totalorder %s22, 1
        %s204 = scalar_select %p203, %s22, 1
        %p205 = scmp.lt.s32.totalorder %s23, 0
        %s206 = scalar_select %p205, %s23, 0
        %s207 = smul.addr %s204, 4
        %s208 = sadd.s32 %s206, %s207
        %s209 = smul.addr %s208, 8
        %s210 = scalar_lea.vmem %s3, %s209
        %p211 = scmp.lt.s32.totalorder %s22, 1
        %s212 = scalar_select %p211, %s22, 1
        %p213 = scmp.lt.s32.totalorder %s23, 0
        %s214 = scalar_select %p213, %s23, 0
        %s215 = smul.addr %s212, 4
        %s216 = sadd.s32 %s214, %s215
        %s217 = smul.addr %s216, 8
        %s218 = scalar_lea.vmem %s0, %s217
        %p219 = scmp.lt.s32.totalorder %s22, 1
        %s220 = scalar_select %p219, %s22, 1
        %s221 = smul.addr %s220, 4
        %s222 = scalar_lea.vmem %s1, %s221
        %p223 = scmp.lt.s32.totalorder %s22, 1
        %s224 = scalar_select %p223, %s22, 1
        %p225 = scmp.lt.s32.totalorder %s23, 0
        %s226 = scalar_select %p225, %s23, 0
        %s227 = smul.addr %s224, 4
        %s228 = sadd.s32 %s226, %s227
        %s229 = smul.addr %s228, 8
        %s230 = scalar_lea.vmem %s3, %s229
        %v231 = vld [vmem:[%s218] sm:$0xff]
        %v232 = vld [vmem:[%s218 + $0x8] sm:$0xff]
        %v233 = vld [vmem:[%s218 + $0x10] sm:$0xff]
        %v234 = vld [vmem:[%s218 + $0x18] sm:$0xff]
        %v235 = vld [vmem:[%s222] sm:$0xf]
        %v236 = vmul.f32 %v235, %v235
        %vm237 = vcmask 257024
        %v238 = vsel %vm237, %v236, 0.0
        %239 = vadd.xlane.f32.xlu0 %v238
        %v240 = vpop.xlane.xlu0 %239
        %vm241 = vcmask 261120
        %v243 = vsel %vm241, %v235, 0
        %245 = vmatprep.subr.mxu0 0.0
        %246 = vmatpush1.msra.mxu0 0.0
        %247 = vmatprep.subr.mxu0 0.0
        %248 = vmatpush1.msra.mxu0 0.0
        %249 = vmatprep.subr.mxu0 0.0
        %250 = vmatpush1.msra.mxu0 0.0
        %251 = vmatprep.subr.mxu0 0.0
        %252 = vmatpush1.msra.mxu0 0.0
        %253 = vmatprep.subr.mxu0 0.0
        %254 = vmatpush1.msra.mxu0 0.0
        %255 = vmatprep.subr.mxu0 0.0
        %256 = vmatpush1.msra.mxu0 0.0
        %257 = vmatprep.subr.mxu0 0.0
        %258 = vmatpush1.msra.mxu0 0.0
        %259 = vmatprep.subr.mxu0 0.0
        %260 = vmatpush1.msra.mxu0 0.0
        %261 = vmatprep.subr.mxu0 0.0
        %262 = vmatpush1.msra.mxu0 0.0
        %263 = vmatprep.subr.mxu0 0.0
        %264 = vmatpush1.msra.mxu0 0.0
        %265 = vmatprep.subr.mxu0 0.0
        %266 = vmatpush1.msra.mxu0 0.0
        %267 = vmatprep.subr.mxu0 0.0
        %268 = vmatpush1.msra.mxu0 0.0
        %269 = vmatprep.subr.mxu0 0.0
        %270 = vmatpush1.msra.mxu0 %v234
        %271 = vmatprep.subr.mxu0 0.0
        %272 = vmatpush1.msra.mxu0 %v233
        %273 = vmatprep.subr.mxu0 0.0
        %274 = vmatpush1.msra.mxu0 %v232
        %275 = vmatprep.subr.mxu0 0.0
        %276 = vmatpush1.msra.mxu0 %v231
        %277 = vmatprep.subr.mxu0 0.0
        %278 = vmatpush2.msra.mxu0 0.0
        %279 = vmatprep.subr.mxu0 0.0
        %280 = vmatpush2.msra.mxu0 0.0
        %281 = vmatprep.subr.mxu0 0.0
        %282 = vmatpush2.msra.mxu0 0.0
        %283 = vmatprep.subr.mxu0 0.0
        %284 = vmatpush2.msra.mxu0 0.0
        %285 = vmatprep.subr.mxu0 0.0
        %286 = vmatpush2.msra.mxu0 0.0
        %287 = vmatprep.subr.mxu0 0.0
        %288 = vmatpush2.msra.mxu0 0.0
        %289 = vmatprep.subr.mxu0 0.0
        %290 = vmatpush2.msra.mxu0 0.0
        %291 = vmatprep.subr.mxu0 0.0
        %292 = vmatpush2.msra.mxu0 0.0
        %293 = vmatprep.subr.mxu0 0.0
        %294 = vmatpush2.msra.mxu0 0.0
        %295 = vmatprep.subr.mxu0 0.0
        %296 = vmatpush2.msra.mxu0 0.0
        %297 = vmatprep.subr.mxu0 0.0
        %298 = vmatpush2.msra.mxu0 0.0
        %299 = vmatprep.subr.mxu0 0.0
        %300 = vmatpush2.msra.mxu0 0.0
        %301 = vmatprep.subr.mxu0 0.0
        %302 = vmatpush2.msra.mxu0 0.0
        %303 = vmatprep.subr.mxu0 0.0
        %304 = vmatpush2.msra.mxu0 0.0
        %305 = vmatprep.subr.mxu0 0.0
        %306 = vmatpush2.msra.mxu0 0.0
        %307 = vmatprep.subr.mxu0 0.0
        %308 = vmatpush2.msra.mxu0 0.0
        %309 = vmatprep.mubr.f32.mxu0 0.0
        %310 = vmatmul.mubr.f32.gmra.mxu0 %v243
        %v311 = vpop.f32.mrf.mxu0
        %v312 = vadd.f32 0.0, %v311
        %v313 = vpop.f32.mrf.mxu0
        %314 = vdwg.mxu0
        %v315 = vmul.f32 %v312, 2.0
        %v316 = vsub.f32 %v240, %v315
        %vm317 = vcmask 125952
        %v318 = vsel %vm317, %v316, inf
        %v319 = vrot.slane %v318, 4
        %v320 = vmin.f32 %v318, %v319
        %v321 = vrot.slane %v320, 2
        %v322 = vmin.f32 %v320, %v321
        %v323 = vrot.slane %v322, 1
        %v324 = vmin.f32 %v322, %v323
        %v325 = vlaneseq
        %v326 = vshrl.u32 %v325, 7
        %vm327 = vcmp.eq.f32.partialorder %v316, %v324
        %v328 = vsel %vm327, %v326, 4
        %v329 = vsel %vm317, %v328, 2147483647
        %v330 = vrot.slane %v329, 4
        %vm331 = vcmp.lt.s32.totalorder %v329, %v330
        %v332 = vsel %vm331, %v329, %v330
        %v333 = vrot.slane %v332, 2
        %vm334 = vcmp.lt.s32.totalorder %v332, %v333
        %v335 = vsel %vm334, %v332, %v333
        %v336 = vrot.slane %v335, 1
        %vm337 = vcmp.lt.s32.totalorder %v335, %v336
        %v338 = vsel %vm337, %v335, %v336
        %vm339 = vcmp.eq.s32.totalorder %v326, %v338
        %v340 = vsel %vm339, 1, 0
        %v341 = vcvt.s32.f32 %v340
        %342 = vxpose.xlu0.b32.start [1/16] %v235, 128
        %343 = vxpose.xlu0.b32.cont [2/16] 0.0, 128
        %344 = vxpose.xlu0.b32.cont [3/16] 0.0, 128
        %345 = vxpose.xlu0.b32.cont [4/16] 0.0, 128
        %346 = vxpose.xlu0.b32.cont [5/16] 0.0, 128
        %347 = vxpose.xlu0.b32.cont [6/16] 0.0, 128
        %348 = vxpose.xlu0.b32.cont [7/16] 0.0, 128
        %349 = vxpose.xlu0.b32.cont [8/16] 0.0, 128
        %350 = vxpose.xlu0.b32.cont [9/16] 0.0, 128
        %351 = vxpose.xlu0.b32.cont [10/16] 0.0, 128
        %352 = vxpose.xlu0.b32.cont [11/16] 0.0, 128
        %353 = vxpose.xlu0.b32.cont [12/16] 0.0, 128
        %354 = vxpose.xlu0.b32.cont [13/16] 0.0, 128
        %355 = vxpose.xlu0.b32.cont [14/16] 0.0, 128
        %356 = vxpose.xlu0.b32.cont [15/16] 0.0, 128
        %357 = vxpose.xlu0.b32.end [16/16] 0.0, 128
        %v358 = vpop.trf.xlu0
        %v359 = vpop.trf.xlu0
        %v360 = vpop.trf.xlu0
        %v361 = vpop.trf.xlu0
        %v362 = vpop.trf.xlu0
        %v363 = vpop.trf.xlu0
        %v364 = vpop.trf.xlu0
        %v365 = vpop.trf.xlu0
        %v366 = vpop.trf.xlu0
        %v367 = vpop.trf.xlu0
        %v368 = vpop.trf.xlu0
        %v369 = vpop.trf.xlu0
        %v370 = vpop.trf.xlu0
        %v371 = vpop.trf.xlu0
        %v372 = vpop.trf.xlu0
        %v373 = vpop.trf.xlu0
        %vm374 = vcmask 31744
        %v376 = vsel %vm374, %v358, 0
        %v379 = vsel %vm374, %v359, 0
        %v382 = vsel %vm374, %v360, 0
        %v385 = vsel %vm374, %v361, 0
        %vm387 = vcmask 1043456
        %v389 = vsel %vm387, %v341, 0
        %391 = vmatprep.subr.mxu0 0.0
        %392 = vmatpush1.msra.mxu0 0.0
        %393 = vmatprep.subr.mxu0 0.0
        %394 = vmatpush1.msra.mxu0 0.0
        %395 = vmatprep.subr.mxu0 0.0
        %396 = vmatpush1.msra.mxu0 0.0
        %397 = vmatprep.subr.mxu0 0.0
        %398 = vmatpush1.msra.mxu0 0.0
        %399 = vmatprep.subr.mxu0 0.0
        %400 = vmatpush1.msra.mxu0 0.0
        %401 = vmatprep.subr.mxu0 0.0
        %402 = vmatpush1.msra.mxu0 0.0
        %403 = vmatprep.subr.mxu0 0.0
        %404 = vmatpush1.msra.mxu0 0.0
        %405 = vmatprep.subr.mxu0 0.0
        %406 = vmatpush1.msra.mxu0 0.0
        %407 = vmatprep.subr.mxu0 0.0
        %408 = vmatpush1.msra.mxu0 0.0
        %409 = vmatprep.subr.mxu0 0.0
        %410 = vmatpush1.msra.mxu0 0.0
        %411 = vmatprep.subr.mxu0 0.0
        %412 = vmatpush1.msra.mxu0 0.0
        %413 = vmatprep.subr.mxu0 0.0
        %414 = vmatpush1.msra.mxu0 0.0
        %415 = vmatprep.subr.mxu0 0.0
        %416 = vmatpush1.msra.mxu0 0.0
        %417 = vmatprep.subr.mxu0 0.0
        %418 = vmatpush1.msra.mxu0 0.0
        %419 = vmatprep.subr.mxu0 0.0
        %420 = vmatpush1.msra.mxu0 0.0
        %421 = vmatprep.subr.mxu0 0.0
        %422 = vmatpush1.msra.mxu0 %v389
        %423 = vmatprep.subr.mxu0 0.0
        %424 = vmatpush2.msra.mxu0 0.0
        %425 = vmatprep.subr.mxu0 0.0
        %426 = vmatpush2.msra.mxu0 0.0
        %427 = vmatprep.subr.mxu0 0.0
        %428 = vmatpush2.msra.mxu0 0.0
        %429 = vmatprep.subr.mxu0 0.0
        %430 = vmatpush2.msra.mxu0 0.0
        %431 = vmatprep.subr.mxu0 0.0
        %432 = vmatpush2.msra.mxu0 0.0
        %433 = vmatprep.subr.mxu0 0.0
        %434 = vmatpush2.msra.mxu0 0.0
        %435 = vmatprep.subr.mxu0 0.0
        %436 = vmatpush2.msra.mxu0 0.0
        %437 = vmatprep.subr.mxu0 0.0
        %438 = vmatpush2.msra.mxu0 0.0
        %439 = vmatprep.subr.mxu0 0.0
        %440 = vmatpush2.msra.mxu0 0.0
        %441 = vmatprep.subr.mxu0 0.0
        %442 = vmatpush2.msra.mxu0 0.0
        %443 = vmatprep.subr.mxu0 0.0
        %444 = vmatpush2.msra.mxu0 0.0
        %445 = vmatprep.subr.mxu0 0.0
        %446 = vmatpush2.msra.mxu0 0.0
        %447 = vmatprep.subr.mxu0 0.0
        %448 = vmatpush2.msra.mxu0 0.0
        %449 = vmatprep.subr.mxu0 0.0
        %450 = vmatpush2.msra.mxu0 0.0
        %451 = vmatprep.subr.mxu0 0.0
        %452 = vmatpush2.msra.mxu0 0.0
        %453 = vmatprep.subr.mxu0 0.0
        %454 = vmatpush2.msra.mxu0 0.0
        %455 = vmatprep.mubr.f32.mxu0 0.0
        %456 = vmatmul.mubr.f32.gmra.mxu0 %v376
        %v457 = vpop.f32.mrf.mxu0
        %v458 = vadd.f32 0.0, %v457
        %v459 = vpop.f32.mrf.mxu0
        %460 = vmatprep.mubr.f32.mxu0 0.0
        %461 = vmatmul.mubr.f32.gmra.mxu0 %v379
        %v462 = vpop.f32.mrf.mxu0
        %v463 = vadd.f32 0.0, %v462
        %v464 = vpop.f32.mrf.mxu0
        %465 = vmatprep.mubr.f32.mxu0 0.0
        %466 = vmatmul.mubr.f32.gmra.mxu0 %v382
        %v467 = vpop.f32.mrf.mxu0
        %v468 = vadd.f32 0.0, %v467
        %v469 = vpop.f32.mrf.mxu0
        %470 = vmatprep.mubr.f32.mxu0 0.0
        %471 = vmatmul.mubr.f32.gmra.mxu0 %v385
        %v472 = vpop.f32.mrf.mxu0
        %v473 = vadd.f32 0.0, %v472
        %v474 = vpop.f32.mrf.mxu0
        %475 = vdwg.mxu0
        %vm476 = vcmask 122880
        %477 = vst.msk [vmem:[%s200] sm:$0x1] %vm476, %v338
        %vm478 = vcmask 130048
        %479 = vst.msk [vmem:[%s230] sm:$0xff] %vm478, %v458
        %480 = vst.msk [vmem:[%s230 + $0x8] sm:$0xff] %vm478, %v463
        %481 = vst.msk [vmem:[%s230 + $0x10] sm:$0xff] %vm478, %v468
        %482 = vst.msk [vmem:[%s230 + $0x18] sm:$0xff] %vm478, %v473
        %s483 = sand.u32 %s94, 1
        %s484 = scalar_lea.sflag [#allocation3], %s483
        %s485 = sand.u32 %s94, 1
        %s486 = scalar_lea.vmem [#allocation2], %s485
        %p487 = scmp.lt.s32.totalorder %s22, 1
        %s488 = scalar_select %p487, %s22, 1
        %p489 = scmp.lt.s32.totalorder %s23, 0
        %s490 = scalar_select %p489, %s23, 0
        %s491 = smul.addr %s488, 4
        %s492 = sadd.s32 %s490, %s491
        %s493 = smul.addr %s492, 8
        %s494 = scalar_lea.vmem %s3, %s493
        // Predicated region
        $region29: #{kmeans_multi_forward_qdn.1} parent=27 // pred_check
          %p495 = pneg %p104
        $region30: #{kmeans_multi_forward_qdn.1} parent=27 // pred_check_branch
          %497 = sbr.rel (%p495) target = $region32
        $region31: #{kmeans_multi_forward_qdn.1} parent=27 // pred_region
          %s499 = ssub.s32 16, 16
          %500 = vsyncadd %s484, %s499
          %s501 = sadd.s32 %s23, %s22
          %s502 = smul.addr %s501, 16
          %s503 = scalar_lea.hbm %s2, %s502
          %s505 = sshll.u32 %s486, 4
          %s506 = int_to_ptr.vmem [resolvable:$true] %s505
          %508 = dma.vmem_to_hbm [thread:$0]  %s506, 16, %s503, %s484
        $region32: #{kmeans_multi_forward_qdn.1} parent=27 // pred_fallthru
          _
        // Predicated region
        $region33: #{kmeans_multi_forward_qdn.1} parent=27 // pred_check
          %p509 = pneg %p132
        $region34: #{kmeans_multi_forward_qdn.1} parent=27 // pred_check_branch
          %511 = sbr.rel (%p509) target = $region36
        $region35: #{kmeans_multi_forward_qdn.1} parent=27 // pred_region
          _
        $region36: #{kmeans_multi_forward_qdn.1} parent=27 // pred_fallthru
          _
      $region28: #{kmeans_multi_forward_qdn.1} parent=5 // pred_fallthru
        _
      %p512 = scmp.le.s32.totalorder 2, %s13
      // Predicated region
      $region37: #{kmeans_multi_forward_qdn.1} parent=5 // pred_check
        %p513 = pneg %p512
      $region38: #{kmeans_multi_forward_qdn.1} parent=5 // pred_check_branch
        %515 = sbr.rel (%p513) target = $region40
      $region39: #{kmeans_multi_forward_qdn.1} parent=5 // pred_region
        %s516 = ssub.s32 %s13, 2
        // Predicated region
        $region41: #{kmeans_multi_forward_qdn.1} parent=39 // pred_check
          %p517 = pneg %p110
        $region42: #{kmeans_multi_forward_qdn.1} parent=39 // pred_check_branch
          %519 = sbr.rel (%p517) target = $region44
        $region43: #{kmeans_multi_forward_qdn.1} parent=39 // pred_region
          %s520 = sand.u32 %s95, 1
          %s521 = scalar_lea.sflag [#allocation3], %s520
          %s522 = sand.u32 %s95, 1
          %s523 = scalar_lea.vmem [#allocation2], %s522
          %524 = dma.done %s521, 16
        $region44: #{kmeans_multi_forward_qdn.1} parent=39 // pred_fallthru
          _
        // Predicated region
        $region45: #{kmeans_multi_forward_qdn.1} parent=39 // pred_check
          %p525 = pneg %p138
        $region46: #{kmeans_multi_forward_qdn.1} parent=39 // pred_check_branch
          %527 = sbr.rel (%p525) target = $region48
        $region47: #{kmeans_multi_forward_qdn.1} parent=39 // pred_region
          %p528 = scmp.lt.s32.totalorder %s24, 1
          %s529 = scalar_select %p528, %s24, 1
          %p530 = scmp.lt.s32.totalorder %s25, 0
          %s531 = scalar_select %p530, %s25, 0
          %s532 = smul.addr %s529, 4
          %s533 = sadd.s32 %s531, %s532
          %s534 = smul.addr %s533, 8
          %s535 = scalar_lea.vmem %s3, %s534
        $region48: #{kmeans_multi_forward_qdn.1} parent=39 // pred_fallthru
          _
      $region40: #{kmeans_multi_forward_qdn.1} parent=5 // pred_fallthru
        _
    $region6: #{kmeans_multi_forward_qdn.1} parent=1 // loop_footer
      %s17 = sadd.s32 1, %s13
    $region7: #{kmeans_multi_forward_qdn.1} parent=1 // loop_footer_branch
      %12 = sbr.rel target = $region3
    $region8: #{kmeans_multi_forward_qdn.1} parent=1 // loop_exit
      _
    %536 = vsyncpa [#allocation3], 1
    %s537 = scalar_lea.sflag [#allocation3], 1
    %538 = vsyncpa %s537, 1

</llo_original>
